<compile_context>
chip_gen: v7x
topology: tpu7x:2x2x1
jax: 0.10.0
libtpu: 0.0.40
codegen_flags: <defaults>
</compile_context>

<pallas_src>
import functools
import math

import jax
import jax.numpy as jnp
from jax.experimental import pallas as pl
from jax.experimental.pallas import tpu as pltpu


def _pair(v):
    return tuple(v) if isinstance(v, (tuple, list)) else (v, v)


# ---------------------------------------------------------------------------
# Fused Pallas kernel: conv (KH matmuls per pooling parity) + 2x2 max-pool + bias.
# ---------------------------------------------------------------------------
def _downsample_kernel(x_ref, w_ref, b_ref, o_ref, *, KH, SH, NPHASE, Ph, Pw, Cout):
    """Per-image fused conv + bias + MaxPool2d(2,2).

    x_ref : (1, NPHASE, Hq, Wp*Cin)   phase-split padded input:
                                      (phase r, row i) = padded row NPHASE*i + r
    w_ref : (KH, Wp*Cin, 2*Pw*Cout)   block-banded folded weights, one matrix per kh tap,
                                      columns ordered [left pool cols | right pool cols]
    b_ref : (1, Pw*Cout)              bias tiled over pooled-W positions
    o_ref : (1, Ph, Pw*Cout)          pooled output, channels innermost on lanes
    """
    half = Pw * Cout                              # lane width of the pooled output row

    def conv_rows(qh):
        # Conv output rows of parity qh (oh = 2*po + qh), all pooled rows po at once.
        acc = jnp.zeros((Ph, 2 * half), jnp.float32)
        for kh in range(KH):
            t = SH * qh + kh                      # padded-input row offset
            r, d = t % NPHASE, t // NPHASE        # phase plane / row shift inside the plane
            lhs = x_ref[0, r, d:d + Ph, :]        # (Ph, Wp*Cin), static contiguous slice
            acc = acc + jnp.dot(lhs, w_ref[kh],
                                preferred_element_type=jnp.float32)
        return acc                                # (Ph, 2*Pw*Cout)

    # Max-pool over H: the two conv-row parities inside each 2x2 pool window.
    z = jnp.maximum(conv_rows(0), conv_rows(1))   # (Ph, 2*Pw*Cout), cols = [left | right]

    # Max-pool over W: columns were pre-permuted so the two pool-window halves are the two
    # lane-aligned halves of z -> one vector max + ONE full-width store.  Bias is constant
    # inside a pool window, so adding it after the max is exact.
    o_ref[0, :, :] = jnp.maximum(z[:, :half], z[:, half:]) + b_ref[...]


# ---------------------------------------------------------------------------
# Wrapper: padding formula of DownsampleBlock.forward + layout prep + pallas_call.
# ---------------------------------------------------------------------------
def downsample_block_forward(params, x_nchw, kernel_size, stride=None, pool="max"):
    if pool != "max":
        raise NotImplementedError("Not support {}".format(pool))
    KH, KW = _pair(kernel_size)
    SH, SW = _pair(kernel_size) if stride is None else _pair(stride)

    w_hwio = params["w"].astype(jnp.float32)      # (KH, KW, Cin, Cout)
    bias = params["b"].astype(jnp.float32)        # (Cout,)
    B, Cin, H, W = x_nchw.shape
    Cout = w_hwio.shape[-1]

    # --- padding exactly as in the PyTorch forward ---------------------------
    pad_h = KH - 1 - (SH - (H - KH) % SH) % SH
    pad_w = KW - 1 - (SW - (W - KW) % SW) % SW
    pad_t, pad_btm = pad_h // 2, pad_h - pad_h // 2
    pad_l, pad_r = pad_w // 2, pad_w - pad_w // 2

    Hp, Wp = H + pad_h, W + pad_w
    Ho = (Hp - KH) // SH + 1                      # conv output height
    Wo = (Wp - KW) // SW + 1                      # conv output width
    Ph, Pw = Ho // 2, Wo // 2                     # MaxPool2d(2,2) output (floor mode)
    Wo_used = 2 * Pw                              # conv columns the pool actually reads

    # --- layout prep: single cheap pass, no im2col amplification -------------
    x = jnp.transpose(x_nchw, (0, 2, 3, 1)).astype(jnp.float32)          # NHWC
    NPHASE = 2 * SH                               # input rows consumed per pooled row
    Hq = -(-Hp // NPHASE)                         # ceil(Hp / NPHASE)
    xp = jnp.pad(x, ((0, 0), (pad_t, pad_btm + Hq * NPHASE - Hp),
                     (pad_l, pad_r), (0, 0)))     # (B, Hq*NPHASE, Wp, Cin)
    # phase split H by NPHASE: xq[b, r, i, wc*Cin + c] = padded[b, NPHASE*i + r, wc, c]
    xq = xp.reshape(B, Hq, NPHASE, Wp, Cin).transpose(0, 2, 1, 3, 4)
    xq = xq.reshape(B, NPHASE, Hq, Wp * Cin)

    # fold W axis + kw taps into a block-banded weight (one matrix per kh tap):
    #   wfold[kh, wc*Cin + c, j*Cout + o] = w[kh, wc - SW*ow_perm[j], c, o]  (0 where off-band)
    # Column blocks are permuted so j <  Pw -> conv col 2*j      (left  of pool window j)
    #                               j >= Pw -> conv col 2*(j-Pw)+1 (right of pool window j-Pw)
    # which makes the W-pool in the kernel a single lane-aligned max of the two halves.
    ow_perm = jnp.concatenate([jnp.arange(0, Wo_used, 2),
                               jnp.arange(1, Wo_used, 2)])                # (Wo_used,)
    wc = jnp.arange(Wp)[:, None]                  # (Wp, 1)
    ow = ow_perm[None, :]                         # (1, Wo_used)
    kw_idx = wc - SW * ow                         # (Wp, Wo_used)
    valid = (kw_idx >= 0) & (kw_idx < KW)
    kw_safe = jnp.clip(kw_idx, 0, KW - 1)
    wfold = w_hwio[:, kw_safe, :, :]              # (KH, Wp, Wo_used, Cin, Cout)
    wfold = wfold * valid[None, :, :, None, None].astype(jnp.float32)
    wfold = wfold.transpose(0, 1, 3, 2, 4).reshape(KH, Wp * Cin, Wo_used * Cout)

    b_tiled = jnp.tile(bias, (Pw,)).reshape(1, Pw * Cout)

    kernel = functools.partial(_downsample_kernel, KH=KH, SH=SH, NPHASE=NPHASE,
                               Ph=Ph, Pw=Pw, Cout=Cout)

    out = pl.pallas_call(
        kernel,
        out_shape=jax.ShapeDtypeStruct((B, Ph, Pw * Cout), jnp.float32),
        grid_spec=pltpu.PrefetchScalarGridSpec(
            num_scalar_prefetch=0,
            grid=(B,),
            in_specs=[
                pl.BlockSpec((1, NPHASE, Hq, Wp * Cin), lambda b: (b, 0, 0, 0)),
                pl.BlockSpec((KH, Wp * Cin, Wo_used * Cout), lambda b: (0, 0, 0)),
                pl.BlockSpec((1, Pw * Cout), lambda b: (0, 0)),
            ],
            out_specs=pl.BlockSpec((1, Ph, Pw * Cout), lambda b: (b, 0, 0)),
        ),
        compiler_params=pltpu.CompilerParams(
            dimension_semantics=("parallel",)),
    )(xq, wfold, b_tiled)

    # (B, Ph, Pw*Cout) -> NCHW (B, Cout, Ph, Pw), matching the PyTorch output layout.
    out = out.reshape(B, Ph, Pw, Cout)
    return jnp.transpose(out, (0, 3, 1, 2))


# ---------------------------------------------------------------------------
# Parameter init (deterministic) — mirrors nn.Conv2d default init scale.
# ---------------------------------------------------------------------------
def init_downsample_block_params(key, in_channels, out_channels, kernel_size):
    KH, KW = _pair(kernel_size)
    k_w, k_b = jax.random.split(key)
    bound = 1.0 / math.sqrt(in_channels * KH * KW)
    w = jax.random.uniform(k_w, (KH, KW, in_channels, out_channels),
                           jnp.float32, -bound, bound)
    b = jax.random.uniform(k_b, (out_channels,), jnp.float32, -bound, bound)
    return {"w": w, "b": b}


# ---------------------------------------------------------------------------
# Pure-JAX reference (for a numerical self-check against the fused kernel).
# ---------------------------------------------------------------------------
def _reference_forward(params, x_nchw, kernel_size, stride=None):
    KH, KW = _pair(kernel_size)
    SH, SW = _pair(kernel_size) if stride is None else _pair(stride)
    _, _, H, W = x_nchw.shape
    pad_h = KH - 1 - (SH - (H - KH) % SH) % SH
    pad_w = KW - 1 - (SW - (W - KW) % SW) % SW
    pad_t, pad_btm = pad_h // 2, pad_h - pad_h // 2
    pad_l, pad_r = pad_w // 2, pad_w - pad_w // 2
    x = jnp.transpose(x_nchw, (0, 2, 3, 1)).astype(jnp.float32)
    y = jax.lax.conv_general_dilated(
        x, params["w"].astype(jnp.float32), window_strides=(SH, SW),
        padding=((pad_t, pad_btm), (pad_l, pad_r)),
        dimension_numbers=("NHWC", "HWIO", "NHWC"))
    y = y + params["b"].astype(jnp.float32)
    y = jax.lax.reduce_window(y, -jnp.inf, jax.lax.max,
                              (1, 2, 2, 1), (1, 2, 2, 1), "VALID")
    return jnp.transpose(y, (0, 3, 1, 2))


if __name__ == "__main__":
    key = jax.random.PRNGKey(0)
    k_param, k_input = jax.random.split(key)

    in_channels, out_channels, kernel_size, stride = 4, 32, 3, 2
    params = init_downsample_block_params(k_param, in_channels, out_channels, kernel_size)
    x = jax.random.normal(k_input, (2, in_channels, 16, 16), jnp.float32)   # (B, C, H, W)

    fwd = jax.jit(functools.partial(downsample_block_forward,
                                    kernel_size=kernel_size, stride=stride))
    out = fwd(params, x)
    jax.block_until_ready(out)

    # (16,16) -> conv(k=3, s=2, asymmetric pad 0/1) -> (8,8) -> maxpool 2x2 -> (4,4)
    assert out.shape == (2, out_channels, 4, 4), out.shape

    ref = _reference_forward(params, x, kernel_size, stride)
    assert jnp.allclose(out, ref, rtol=1e-4, atol=1e-4), float(jnp.max(jnp.abs(out - ref)))

    print("KERNEL_OK")
</pallas_src>

<mosaic_0001>
module attributes {stable_mosaic.version = 11 : i64} {
  func.func @_downsample_kernel(%arg0: i32, %arg1: memref<1x4x5x68xf32, #tpu.memory_space<vmem>>, %arg2: memref<3x68x256xf32, #tpu.memory_space<vmem>>, %arg3: memref<1x128xf32, #tpu.memory_space<vmem>>, %arg4: memref<1x4x128xf32, #tpu.memory_space<vmem>>) attributes {dimension_semantics = [#tpu.dimension_semantics<parallel>], iteration_bounds = array<i64: 2>, scalar_prefetch = 0 : i64, scratch_operands = 0 : i64, tpu.core_type = #tpu.core_type<tc>, window_params = [{transform_indices = @transform_0, window_bounds = array<i64: 1, 4, 5, 68>}, {pipeline_mode = #tpu.pipeline_mode<synchronous>, transform_indices = @transform_1, window_bounds = array<i64: 3, 68, 256>}, {pipeline_mode = #tpu.pipeline_mode<synchronous>, transform_indices = @transform_2, window_bounds = array<i64: 1, 128>}, {transform_indices = @transform_3, window_bounds = array<i64: 1, 4, 128>}]} {
    %cst = arith.constant 0.000000e+00 : f32
    %0 = vector.broadcast %cst : f32 to vector<4x256xf32>
    %c0 = arith.constant 0 : index
    %c0_0 = arith.constant 0 : index
    %c0_1 = arith.constant 0 : index
    %c0_2 = arith.constant 0 : index
    %1 = vector.load %arg1[%c0, %c0_0, %c0_1, %c0_2] : memref<1x4x5x68xf32, #tpu.memory_space<vmem>>, vector<1x1x4x68xf32>
    %2 = vector.shape_cast %1 : vector<1x1x4x68xf32> to vector<4x68xf32>
    %c0_3 = arith.constant 0 : index
    %c0_4 = arith.constant 0 : index
    %c0_5 = arith.constant 0 : index
    %3 = vector.load %arg2[%c0_3, %c0_4, %c0_5] : memref<3x68x256xf32, #tpu.memory_space<vmem>>, vector<1x68x256xf32>
    %4 = vector.shape_cast %3 : vector<1x68x256xf32> to vector<68x256xf32>
    %cst_6 = arith.constant dense<0.000000e+00> : vector<4x256xf32>
    %5 = tpu.matmul %2, %4, %cst_6 {dimension_numbers = #tpu.dot_dimension_numbers<[1], [0], [0], [1], [0, 0, 1, 1], [], []>} : vector<4x68xf32>, vector<68x256xf32>, vector<4x256xf32> -> vector<4x256xf32>
    %6 = arith.addf %0, %5 : vector<4x256xf32>
    %c0_7 = arith.constant 0 : index
    %c1 = arith.constant 1 : index
    %c0_8 = arith.constant 0 : index
    %c0_9 = arith.constant 0 : index
    %7 = vector.load %arg1[%c0_7, %c1, %c0_8, %c0_9] : memref<1x4x5x68xf32, #tpu.memory_space<vmem>>, vector<1x1x4x68xf32>
    %8 = vector.shape_cast %7 : vector<1x1x4x68xf32> to vector<4x68xf32>
    %c1_10 = arith.constant 1 : index
    %c0_11 = arith.constant 0 : index
    %c0_12 = arith.constant 0 : index
    %9 = vector.load %arg2[%c1_10, %c0_11, %c0_12] : memref<3x68x256xf32, #tpu.memory_space<vmem>>, vector<1x68x256xf32>
    %10 = vector.shape_cast %9 : vector<1x68x256xf32> to vector<68x256xf32>
    %cst_13 = arith.constant dense<0.000000e+00> : vector<4x256xf32>
    %11 = tpu.matmul %8, %10, %cst_13 {dimension_numbers = #tpu.dot_dimension_numbers<[1], [0], [0], [1], [0, 0, 1, 1], [], []>} : vector<4x68xf32>, vector<68x256xf32>, vector<4x256xf32> -> vector<4x256xf32>
    %12 = arith.addf %6, %11 : vector<4x256xf32>
    %c0_14 = arith.constant 0 : index
    %c2 = arith.constant 2 : index
    %c0_15 = arith.constant 0 : index
    %c0_16 = arith.constant 0 : index
    %13 = vector.load %arg1[%c0_14, %c2, %c0_15, %c0_16] : memref<1x4x5x68xf32, #tpu.memory_space<vmem>>, vector<1x1x4x68xf32>
    %14 = vector.shape_cast %13 : vector<1x1x4x68xf32> to vector<4x68xf32>
    %c2_17 = arith.constant 2 : index
    %c0_18 = arith.constant 0 : index
    %c0_19 = arith.constant 0 : index
    %15 = vector.load %arg2[%c2_17, %c0_18, %c0_19] : memref<3x68x256xf32, #tpu.memory_space<vmem>>, vector<1x68x256xf32>
    %16 = vector.shape_cast %15 : vector<1x68x256xf32> to vector<68x256xf32>
    %cst_20 = arith.constant dense<0.000000e+00> : vector<4x256xf32>
    %17 = tpu.matmul %14, %16, %cst_20 {dimension_numbers = #tpu.dot_dimension_numbers<[1], [0], [0], [1], [0, 0, 1, 1], [], []>} : vector<4x68xf32>, vector<68x256xf32>, vector<4x256xf32> -> vector<4x256xf32>
    %18 = arith.addf %12, %17 : vector<4x256xf32>
    %cst_21 = arith.constant 0.000000e+00 : f32
    %19 = vector.broadcast %cst_21 : f32 to vector<4x256xf32>
    %c0_22 = arith.constant 0 : index
    %c2_23 = arith.constant 2 : index
    %c0_24 = arith.constant 0 : index
    %c0_25 = arith.constant 0 : index
    %20 = vector.load %arg1[%c0_22, %c2_23, %c0_24, %c0_25] : memref<1x4x5x68xf32, #tpu.memory_space<vmem>>, vector<1x1x4x68xf32>
    %21 = vector.shape_cast %20 : vector<1x1x4x68xf32> to vector<4x68xf32>
    %c0_26 = arith.constant 0 : index
    %c0_27 = arith.constant 0 : index
    %c0_28 = arith.constant 0 : index
    %22 = vector.load %arg2[%c0_26, %c0_27, %c0_28] : memref<3x68x256xf32, #tpu.memory_space<vmem>>, vector<1x68x256xf32>
    %23 = vector.shape_cast %22 : vector<1x68x256xf32> to vector<68x256xf32>
    %cst_29 = arith.constant dense<0.000000e+00> : vector<4x256xf32>
    %24 = tpu.matmul %21, %23, %cst_29 {dimension_numbers = #tpu.dot_dimension_numbers<[1], [0], [0], [1], [0, 0, 1, 1], [], []>} : vector<4x68xf32>, vector<68x256xf32>, vector<4x256xf32> -> vector<4x256xf32>
    %25 = arith.addf %19, %24 : vector<4x256xf32>
    %c0_30 = arith.constant 0 : index
    %c3 = arith.constant 3 : index
    %c0_31 = arith.constant 0 : index
    %c0_32 = arith.constant 0 : index
    %26 = vector.load %arg1[%c0_30, %c3, %c0_31, %c0_32] : memref<1x4x5x68xf32, #tpu.memory_space<vmem>>, vector<1x1x4x68xf32>
    %27 = vector.shape_cast %26 : vector<1x1x4x68xf32> to vector<4x68xf32>
    %c1_33 = arith.constant 1 : index
    %c0_34 = arith.constant 0 : index
    %c0_35 = arith.constant 0 : index
    %28 = vector.load %arg2[%c1_33, %c0_34, %c0_35] : memref<3x68x256xf32, #tpu.memory_space<vmem>>, vector<1x68x256xf32>
    %29 = vector.shape_cast %28 : vector<1x68x256xf32> to vector<68x256xf32>
    %cst_36 = arith.constant dense<0.000000e+00> : vector<4x256xf32>
    %30 = tpu.matmul %27, %29, %cst_36 {dimension_numbers = #tpu.dot_dimension_numbers<[1], [0], [0], [1], [0, 0, 1, 1], [], []>} : vector<4x68xf32>, vector<68x256xf32>, vector<4x256xf32> -> vector<4x256xf32>
    %31 = arith.addf %25, %30 : vector<4x256xf32>
    %c0_37 = arith.constant 0 : index
    %c0_38 = arith.constant 0 : index
    %c1_39 = arith.constant 1 : index
    %c0_40 = arith.constant 0 : index
    %32 = vector.load %arg1[%c0_37, %c0_38, %c1_39, %c0_40] : memref<1x4x5x68xf32, #tpu.memory_space<vmem>>, vector<1x1x4x68xf32>
    %33 = vector.shape_cast %32 : vector<1x1x4x68xf32> to vector<4x68xf32>
    %c2_41 = arith.constant 2 : index
    %c0_42 = arith.constant 0 : index
    %c0_43 = arith.constant 0 : index
    %34 = vector.load %arg2[%c2_41, %c0_42, %c0_43] : memref<3x68x256xf32, #tpu.memory_space<vmem>>, vector<1x68x256xf32>
    %35 = vector.shape_cast %34 : vector<1x68x256xf32> to vector<68x256xf32>
    %cst_44 = arith.constant dense<0.000000e+00> : vector<4x256xf32>
    %36 = tpu.matmul %33, %35, %cst_44 {dimension_numbers = #tpu.dot_dimension_numbers<[1], [0], [0], [1], [0, 0, 1, 1], [], []>} : vector<4x68xf32>, vector<68x256xf32>, vector<4x256xf32> -> vector<4x256xf32>
    %37 = arith.addf %31, %36 : vector<4x256xf32>
    %38 = arith.maximumf %18, %37 : vector<4x256xf32>
    %39 = vector.extract_strided_slice %38 {offsets = [0, 0], sizes = [4, 128], strides = [1, 1]} : vector<4x256xf32> to vector<4x128xf32>
    %40 = vector.extract_strided_slice %38 {offsets = [0, 128], sizes = [4, 128], strides = [1, 1]} : vector<4x256xf32> to vector<4x128xf32>
    %41 = arith.maximumf %39, %40 : vector<4x128xf32>
    %c0_45 = arith.constant 0 : index
    %c0_46 = arith.constant 0 : index
    %42 = vector.load %arg3[%c0_45, %c0_46] : memref<1x128xf32, #tpu.memory_space<vmem>>, vector<1x128xf32>
    %43 = vector.broadcast %42 : vector<1x128xf32> to vector<4x128xf32>
    %44 = arith.addf %41, %43 : vector<4x128xf32>
    %c0_47 = arith.constant 0 : index
    %c0_48 = arith.constant 0 : index
    %c0_49 = arith.constant 0 : index
    %45 = vector.load %arg4[%c0_47, %c0_48, %c0_49] : memref<1x4x128xf32, #tpu.memory_space<vmem>>, vector<1x4x128xf32>
    %46 = vector.shape_cast %45 : vector<1x4x128xf32> to vector<4x128xf32>
    %47 = vector.shape_cast %44 : vector<4x128xf32> to vector<1x4x128xf32>
    tpu.vector_store %arg4[%c0_47, %c0_48, %c0_49], %47 {strides = array<i32>} : memref<1x4x128xf32, #tpu.memory_space<vmem>>, vector<1x4x128xf32>,
    return
  }
  func.func @transform_0(%arg0: i32) -> (i32, i32, i32, i32) {
    %c0_i32 = arith.constant 0 : i32
    %c0_i32_0 = arith.constant 0 : i32
    %c0_i32_1 = arith.constant 0 : i32
    %c0_i32_2 = arith.constant 0 : i32
    return %arg0, %c0_i32, %c0_i32_0, %c0_i32_1 : i32, i32, i32, i32
  }
  func.func @transform_1(%arg0: i32) -> (i32, i32, i32) {
    %c0_i32 = arith.constant 0 : i32
    %c0_i32_0 = arith.constant 0 : i32
    %c0_i32_1 = arith.constant 0 : i32
    %c0_i32_2 = arith.constant 0 : i32
    return %c0_i32, %c0_i32_0, %c0_i32_1 : i32, i32, i32
  }
  func.func @transform_2(%arg0: i32) -> (i32, i32) {
    %c0_i32 = arith.constant 0 : i32
    %c0_i32_0 = arith.constant 0 : i32
    %c0_i32_1 = arith.constant 0 : i32
    return %c0_i32, %c0_i32_0 : i32, i32
  }
  func.func @transform_3(%arg0: i32) -> (i32, i32, i32) {
    %c0_i32 = arith.constant 0 : i32
    %c0_i32_0 = arith.constant 0 : i32
    %c0_i32_1 = arith.constant 0 : i32
    return %arg0, %c0_i32, %c0_i32_0 : i32, i32, i32
  }
}

</mosaic_0001>

<llo_original>
// kernel: tile.8
$region0: #{tile.8}
  #allocation0 [shape = 's32[1]{0}', space=sflag, size = 0x4, scoped, tag = 'scoped memory for tile.8']
  %s0 = inlined_call_operand.vmem [shape: f32[32], index: 0, kind: input, shape index: {}]
  %s1 = inlined_call_operand.vmem [shape: f32[4,32], index: 1, kind: output, shape index: {}]
  // Predicated region
  $region2: #{tile.8} parent=0 // pred_check
    _
  $region3: #{tile.8} parent=0 // pred_check_branch
    %3 = sbr.rel (0) target = $region5
  $region4: #{tile.8} parent=0 // pred_region
    _
  $region5: #{tile.8} parent=0 // pred_fallthru
    _
  %v4 = vld [vmem:[%s0] ss:$0 sm:$0xff]
  %5 = vst [vmem:[%s1] sm:$0xf] %v4

// kernel: tile.9
$region0: #{tile.9}
  %s0 = inlined_call_operand.vmem [shape: f32[4,32], index: 0, kind: input, shape index: {}]
  %s1 = inlined_call_operand.vmem [shape: f32[1,128], index: 1, kind: output, shape index: {}]
  $region1: #{tile.9} parent=0
    #allocation0 [shape = 'u8[4096]{0}', space=vmem, size = 0x1000, scoped, tag = 'scoped mem for output reshape']
    #allocation1 [shape = 'u8[4096]{0}', space=vmem, size = 0x1000, scoped, tag = 'scoped mem for input reshape']
    %s3 = sshllo.u32 0, 4
    %v4 = vld [vmem:[%s0] sm:%s3]
    %5 = vst [vmem:[#allocation1] sm:%s3] %v4
    %v6 = vld [vmem:[#allocation1] sm:$0x1]
    %vm7 = vcmask 261120
    %8 = vst.msk [vmem:[#allocation0] sm:$0x1] %vm7, %v6
    %s9 = scalar_lea.vmem [#allocation1], 3
    %v10 = vld [vmem:[%s9] sm:$0x1]
    %11 = vrot.lane.b32.xlu0 %v10, 96
    %v12 = vpop.permute.xlu0 %11
    %vm13 = vcmask 1048320
    %14 = vst.msk [vmem:[#allocation0] sm:$0x1] %vm13, %v12
    %s15 = scalar_lea.vmem [#allocation1], 2
    %v16 = vld [vmem:[%s15] sm:$0x1]
    %17 = vrot.lane.b32.xlu0 %v16, 64
    %v18 = vpop.permute.xlu0 %17
    %vm19 = vcmask 785920
    %20 = vst.msk [vmem:[#allocation0] sm:$0x1] %vm19, %v18
    %s21 = scalar_lea.vmem [#allocation1], 1
    %v22 = vld [vmem:[%s21] sm:$0x1]
    %23 = vrot.lane.b32.xlu0 %v22, 32
    %v24 = vpop.permute.xlu0 %23
    %vm25 = vcmask 523520
    %26 = vst.msk [vmem:[#allocation0] sm:$0x1] %vm25, %v24
    %s28 = sshllo.u32 0, 1
    %v30 = vld [vmem:[#allocation0] sm:%s28]
    %s31 = sshllo.u32 0, 1
    %32 = vst [vmem:[%s1] sm:%s31] %v30

// kernel: downsample_block_forward.1
$region0: #{downsample_block_forward.1}
  #allocation0 [shape = 'u32[]', space=smem, size = 0x4, offset = 0x4, fixed_abs, tag = 'smem constant byte address 0x4 - core index']
  #allocation1 [shape = 'u32[144,128]{1,0:T(1,128)}', space=vmem, size = 0x12000, scoped, tag = 'internal scratch']
  %s0 = inlined_call_operand.vmem [shape: f32[2,4,5,68], index: 0, kind: input, shape index: {}]
  %s1 = inlined_call_operand.vmem [shape: f32[3,68,256], index: 1, kind: input, shape index: {}]
  %s2 = inlined_call_operand.vmem [shape: f32[1,128], index: 2, kind: input, shape index: {}]
  %s3 = inlined_call_operand.vmem [shape: f32[2,4,128], index: 3, kind: output, shape index: {}]
  %s4 = sld [smem:[#allocation0]]
  $region45: #{downsample_block_forward.1} parent=0
    _
  %s6 = ssub.s32 1, %s4
  %s7 = scalar_select 0, %s6, %s4
  loop: start=0, step=1, limit=4
  $region2: #{downsample_block_forward.1} parent=0 // loop_pre_header
    _
  $region3: #{downsample_block_forward.1} parent=0 // loop_header
    %s9 = sphi 0, %s13
    %p10 = scmp.ge.s32.totalorder %s9, 4
    %s19 = sphi 0, %s21
    %s22 = sphi 0, %s19
    %s23 = sphi 0, %s22
    %s39 = sphi 0, %s23
    %s43 = sphi 0, %s43
    %s45 = sphi 0, %s43
    %s46 = sphi 0, %s45
    %s60 = sphi 0, %s46
    %s64 = sphi 0, %s64
    %s66 = sphi 0, %s64
    %s67 = sphi 0, %s66
    %s81 = sphi 0, %s67
    %s87 = sphi 0, %s89
    %s90 = sphi 0, %s87
    %s91 = sphi 0, %s90
    %s107 = sphi 0, %s91
  $region4: #{downsample_block_forward.1} parent=0 // loop_header_branch
    %12 = sbr.rel (%p10) target = $region8
  $region5: #{downsample_block_forward.1} parent=0 // loop_body
    %s14 = ssub.s32 %s9, 1
    %s15 = ssub.s32 %s9, 2
    %s16 = sadd.s32 %s9, 1
    %s17 = ssub.s32 %s9, %s16
    %p18 = scmp.eq.s32.totalorder %s17, 0
    %s20 = sadd.s32 %s19, 1
    %s21 = scalar_select %p18, %s19, %s20
    %p24 = pneg %p18
    %p25 = scmp.eq.s32.totalorder %s9, 1
    %p26 = por %p24, %p25
    %p27 = scmp.ne.s32.totalorder %s19, %s22
    %p28 = scmp.eq.s32.totalorder %s9, 0
    %p29 = por %p27, %p28
    %p30 = scmp.ne.s32.totalorder %s19, %s22
    %p31 = scmp.eq.s32.totalorder %s14, 1
    %p32 = por %p30, %p31
    %p33 = scmp.ne.s32.totalorder %s22, %s23
    %p34 = scmp.eq.s32.totalorder %s14, 0
    %p35 = por %p33, %p34
    %p36 = scmp.ne.s32.totalorder %s22, %s23
    %p37 = scmp.eq.s32.totalorder %s15, 1
    %p38 = por %p36, %p37
    %p40 = scmp.ne.s32.totalorder %s23, %s39
    %p41 = scmp.eq.s32.totalorder %s15, 0
    %p42 = por %p40, %p41
    %s44 = sadd.s32 %s43, 1
    %p47 = scmp.eq.s32.totalorder %s9, 1
    %p48 = scmp.ne.s32.totalorder %s43, %s45
    %p49 = scmp.eq.s32.totalorder %s9, 0
    %p50 = por %p48, %p49
    %p51 = scmp.ne.s32.totalorder %s43, %s45
    %p52 = scmp.eq.s32.totalorder %s14, 1
    %p53 = por %p51, %p52
    %p54 = scmp.ne.s32.totalorder %s45, %s46
    %p55 = scmp.eq.s32.totalorder %s14, 0
    %p56 = por %p54, %p55
    %p57 = scmp.ne.s32.totalorder %s45, %s46
    %p58 = scmp.eq.s32.totalorder %s15, 1
    %p59 = por %p57, %p58
    %p61 = scmp.ne.s32.totalorder %s46, %s60
    %p62 = scmp.eq.s32.totalorder %s15, 0
    %p63 = por %p61, %p62
    %s65 = sadd.s32 %s64, 1
    %p68 = scmp.eq.s32.totalorder %s9, 1
    %p69 = scmp.ne.s32.totalorder %s64, %s66
    %p70 = scmp.eq.s32.totalorder %s9, 0
    %p71 = por %p69, %p70
    %p72 = scmp.ne.s32.totalorder %s64, %s66
    %p73 = scmp.eq.s32.totalorder %s14, 1
    %p74 = por %p72, %p73
    %p75 = scmp.ne.s32.totalorder %s66, %s67
    %p76 = scmp.eq.s32.totalorder %s14, 0
    %p77 = por %p75, %p76
    %p78 = scmp.ne.s32.totalorder %s66, %s67
    %p79 = scmp.eq.s32.totalorder %s15, 1
    %p80 = por %p78, %p79
    %p82 = scmp.ne.s32.totalorder %s67, %s81
    %p83 = scmp.eq.s32.totalorder %s15, 0
    %p84 = por %p82, %p83
    %s85 = ssub.s32 %s9, %s16
    %p86 = scmp.eq.s32.totalorder %s85, 0
    %s88 = sadd.s32 %s87, 1
    %s89 = scalar_select %p86, %s87, %s88
    %p92 = pneg %p86
    %p93 = scmp.eq.s32.totalorder %s9, 1
    %p94 = por %p92, %p93
    %p95 = scmp.ne.s32.totalorder %s87, %s90
    %p96 = scmp.eq.s32.totalorder %s9, 0
    %p97 = por %p95, %p96
    %p98 = scmp.ne.s32.totalorder %s87, %s90
    %p99 = scmp.eq.s32.totalorder %s14, 1
    %p100 = por %p98, %p99
    %p101 = scmp.ne.s32.totalorder %s90, %s91
    %p102 = scmp.eq.s32.totalorder %s14, 0
    %p103 = por %p101, %p102
    %p104 = scmp.ne.s32.totalorder %s90, %s91
    %p105 = scmp.eq.s32.totalorder %s15, 1
    %p106 = por %p104, %p105
    %p108 = scmp.ne.s32.totalorder %s91, %s107
    %p109 = scmp.eq.s32.totalorder %s15, 0
    %p110 = por %p108, %p109
    %p111 = scmp.le.s32.totalorder 1, %s9
    %p112 = scmp.lt.s32.totalorder %s9, 3
    %p113 = pnand %p111, %p112
    %p114 = pneg %p113
    // Predicated region
    $region9: #{downsample_block_forward.1} parent=5 // pred_check
      _
    $region10: #{downsample_block_forward.1} parent=5 // pred_check_branch
      %116 = sbr.rel (%p113) target = $region12
    $region11: #{downsample_block_forward.1} parent=5 // pred_region
      %s117 = ssub.s32 %s9, 1
      // Predicated region
      $region13: #{downsample_block_forward.1} parent=11 // pred_check
        %p118 = pneg %p56
      $region14: #{downsample_block_forward.1} parent=11 // pred_check_branch
        %120 = sbr.rel (%p118) target = $region16
      $region15: #{downsample_block_forward.1} parent=11 // pred_region
        _
      $region16: #{downsample_block_forward.1} parent=11 // pred_fallthru
        _
      // Predicated region
      $region17: #{downsample_block_forward.1} parent=11 // pred_check
        %p121 = pneg %p77
      $region18: #{downsample_block_forward.1} parent=11 // pred_check_branch
        %123 = sbr.rel (%p121) target = $region20
      $region19: #{downsample_block_forward.1} parent=11 // pred_region
        _
      $region20: #{downsample_block_forward.1} parent=11 // pred_fallthru
        _
    $region12: #{downsample_block_forward.1} parent=5 // pred_fallthru
      _
    %p124 = scmp.lt.s32.totalorder %s9, 2
    // Predicated region
    $region21: #{downsample_block_forward.1} parent=5 // pred_check
      %p125 = pneg %p124
    $region22: #{downsample_block_forward.1} parent=5 // pred_check_branch
      %127 = sbr.rel (%p125) target = $region24
    $region23: #{downsample_block_forward.1} parent=5 // pred_region
      // Predicated region
      $region25: #{downsample_block_forward.1} parent=23 // pred_check
        %p128 = pneg %p29
      $region26: #{downsample_block_forward.1} parent=23 // pred_check_branch
        %130 = sbr.rel (%p128) target = $region28
      $region27: #{downsample_block_forward.1} parent=23 // pred_region
        %p131 = scmp.lt.s32.totalorder %s9, 1
        %s132 = scalar_select %p131, %s9, 1
        %s133 = smul.addr %s132, 4
        %s134 = smul.addr %s133, 8
        %s135 = scalar_lea.vmem %s0, %s134
      $region28: #{downsample_block_forward.1} parent=23 // pred_fallthru
        _
    $region24: #{downsample_block_forward.1} parent=5 // pred_fallthru
      _
    %p136 = scmp.le.s32.totalorder 1, %s9
    %p137 = scmp.lt.s32.totalorder %s9, 3
    %p138 = pnand %p136, %p137
    %p139 = pneg %p138
    // Predicated region
    $region29: #{downsample_block_forward.1} parent=5 // pred_check
      _
    $region30: #{downsample_block_forward.1} parent=5 // pred_check_branch
      %141 = sbr.rel (%p138) target = $region32
    $region31: #{downsample_block_forward.1} parent=5 // pred_region
      %s142 = ssub.s32 %s9, 1
      %p143 = scmp.lt.s32.totalorder %s14, 1
      %s144 = scalar_select %p143, %s14, 1
      %s145 = smul.addr %s144, 4
      %s146 = smul.addr %s145, 8
      %s147 = scalar_lea.vmem %s0, %s146
      %p148 = pneg %p35
      %p149 = pneg %p32
      %p150 = pneg %p56
      %p151 = pneg %p53
      %p152 = pneg %p77
      %p153 = pneg %p74
      %p154 = pneg %p103
      %p155 = pneg %p100
      %p156 = scmp.lt.s32.totalorder %s14, 1
      %s157 = scalar_select %p156, %s14, 1
      %s158 = smul.addr %s157, 4
      %s159 = scalar_lea.vmem %s3, %s158
      %p160 = scmp.lt.s32.totalorder %s14, 1
      %s161 = scalar_select %p160, %s14, 1
      %s162 = smul.addr %s161, 4
      %s163 = smul.addr %s162, 8
      %s164 = scalar_lea.vmem %s0, %s163
      %p165 = scmp.lt.s32.totalorder %s14, 1
      %s166 = scalar_select %p165, %s14, 1
      %s167 = smul.addr %s166, 4
      %s168 = scalar_lea.vmem %s3, %s167
      %v169 = vld [vmem:[%s164] sm:$0xf]
      %v170 = vld [vmem:[%s1] sm:$0xff]
      %v171 = vld [vmem:[%s1 + $0x8] sm:$0xff]
      %v172 = vld [vmem:[%s1 + $0x10] sm:$0xff]
      %v173 = vld [vmem:[%s1 + $0x18] sm:$0xff]
      %v174 = vld [vmem:[%s1 + $0x20] sm:$0xff]
      %v175 = vld [vmem:[%s1 + $0x28] sm:$0xff]
      %v176 = vld [vmem:[%s1 + $0x30] sm:$0xff]
      %v177 = vld [vmem:[%s1 + $0x38] sm:$0xff]
      %v178 = vld [vmem:[%s1 + $0x40] sm:$0xff]
      %v179 = vld [vmem:[%s1 + $0x48] sm:$0xff]
      %v180 = vld [vmem:[%s1 + $0x50] sm:$0xff]
      %v181 = vld [vmem:[%s1 + $0x58] sm:$0xff]
      %v182 = vld [vmem:[%s1 + $0x60] sm:$0xff]
      %v183 = vld [vmem:[%s1 + $0x68] sm:$0xff]
      %v184 = vld [vmem:[%s1 + $0x70] sm:$0xff]
      %v185 = vld [vmem:[%s1 + $0x78] sm:$0xff]
      %v186 = vld [vmem:[%s1 + $0x80] sm:$0xf]
      %v187 = vld [vmem:[%s1 + $0x88] sm:$0xf]
      %s188 = scalar_lea.vmem %s164, 8
      %v189 = vld [vmem:[%s188] sm:$0xf]
      %s190 = scalar_lea.vmem %s1, 144
      %v191 = vld [vmem:[%s190] sm:$0xff]
      %v192 = vld [vmem:[%s190 + $0x8] sm:$0xff]
      %v193 = vld [vmem:[%s190 + $0x10] sm:$0xff]
      %v194 = vld [vmem:[%s190 + $0x18] sm:$0xff]
      %v195 = vld [vmem:[%s190 + $0x20] sm:$0xff]
      %v196 = vld [vmem:[%s190 + $0x28] sm:$0xff]
      %v197 = vld [vmem:[%s190 + $0x30] sm:$0xff]
      %v198 = vld [vmem:[%s190 + $0x38] sm:$0xff]
      %v199 = vld [vmem:[%s190 + $0x40] sm:$0xff]
      %v200 = vld [vmem:[%s190 + $0x48] sm:$0xff]
      %v201 = vld [vmem:[%s190 + $0x50] sm:$0xff]
      %v202 = vld [vmem:[%s190 + $0x58] sm:$0xff]
      %v203 = vld [vmem:[%s190 + $0x60] sm:$0xff]
      %v204 = vld [vmem:[%s190 + $0x68] sm:$0xff]
      %v205 = vld [vmem:[%s190 + $0x70] sm:$0xff]
      %v206 = vld [vmem:[%s190 + $0x78] sm:$0xff]
      %v207 = vld [vmem:[%s190 + $0x80] sm:$0xf]
      %v208 = vld [vmem:[%s190 + $0x88] sm:$0xf]
      %vm209 = vcmask 556032
      %v211 = vsel %vm209, %v189, 0
      %vm213 = vcmask 1043456
      %v215 = vsel %vm213, %v207, 0
      %v218 = vsel %vm213, %v208, 0
      %220 = vmatprep.subr.mxu0 %v192
      %221 = vmatpush1.msra.mxu0 %v191
      %222 = vmatprep.subr.mxu0 %v194
      %223 = vmatpush1.msra.mxu0 %v193
      %224 = vmatprep.subr.mxu0 %v196
      %225 = vmatpush1.msra.mxu0 %v195
      %226 = vmatprep.subr.mxu0 %v198
      %227 = vmatpush1.msra.mxu0 %v197
      %228 = vmatprep.subr.mxu0 %v200
      %229 = vmatpush1.msra.mxu0 %v199
      %230 = vmatprep.subr.mxu0 %v202
      %231 = vmatpush1.msra.mxu0 %v201
      %232 = vmatprep.subr.mxu0 %v204
      %233 = vmatpush1.msra.mxu0 %v203
      %234 = vmatprep.subr.mxu0 %v206
      %235 = vmatpush1.msra.mxu0 %v205
      %236 = vmatprep.subr.mxu0 %v218
      %237 = vmatpush1.msra.mxu0 %v215
      %238 = vmatprep.subr.mxu0 0.0
      %239 = vmatpush1.msra.mxu0 0.0
      %240 = vmatprep.subr.mxu0 0.0
      %241 = vmatpush1.msra.mxu0 0.0
      %242 = vmatprep.subr.mxu0 0.0
      %243 = vmatpush1.msra.mxu0 0.0
      %244 = vmatprep.subr.mxu0 0.0
      %245 = vmatpush1.msra.mxu0 0.0
      %246 = vmatprep.subr.mxu0 0.0
      %247 = vmatpush1.msra.mxu0 0.0
      %248 = vmatprep.subr.mxu0 0.0
      %249 = vmatpush1.msra.mxu0 0.0
      %250 = vmatprep.subr.mxu0 0.0
      %251 = vmatpush1.msra.mxu0 0.0
      %252 = vmatprep.subr.mxu0 0.0
      %253 = vmatpush1.msra.mxu0 0.0
      %254 = vmatprep.subr.mxu0 0.0
      %255 = vmatpush1.msra.mxu0 0.0
      %256 = vmatprep.subr.mxu0 0.0
      %257 = vmatpush1.msra.mxu0 0.0
      %258 = vmatprep.subr.mxu0 0.0
      %259 = vmatpush1.msra.mxu0 0.0
      %260 = vmatprep.subr.mxu0 0.0
      %261 = vmatpush1.msra.mxu0 0.0
      %262 = vmatprep.subr.mxu0 0.0
      %263 = vmatpush1.msra.mxu0 0.0
      %264 = vmatprep.subr.mxu0 0.0
      %265 = vmatpush1.msra.mxu0 0.0
      %266 = vmatprep.subr.mxu0 0.0
      %267 = vmatpush1.msra.mxu0 0.0
      %268 = vmatprep.subr.mxu0 0.0
      %269 = vmatpush1.msra.mxu0 0.0
      %270 = vmatprep.subr.mxu0 0.0
      %271 = vmatpush1.msra.mxu0 0.0
      %272 = vmatprep.subr.mxu0 0.0
      %273 = vmatpush1.msra.mxu0 0.0
      %274 = vmatprep.subr.mxu0 0.0
      %275 = vmatpush1.msra.mxu0 0.0
      %276 = vmatprep.subr.mxu0 0.0
      %277 = vmatpush1.msra.mxu0 0.0
      %278 = vmatprep.subr.mxu0 0.0
      %279 = vmatpush1.msra.mxu0 0.0
      %280 = vmatprep.subr.mxu0 0.0
      %281 = vmatpush1.msra.mxu0 0.0
      %282 = vmatprep.subr.mxu0 0.0
      %283 = vmatpush1.msra.mxu0 0.0
      %284 = vmatprep.mubr.f32.mxu0 0.0
      %285 = vmatmul.mubr.f32.gmra.mrb[0].mxu0 %v211
      %v286 = vpop.f32.mrb[0].mxu0
      %v287 = vadd.f32 0.0, %v286
      %v288 = vpop.f32.mrb[0].mxu0
      %v289 = vadd.f32 0.0, %v288
      %290 = vdwg.mxu0
      %v292 = vsel %vm209, %v169, 0
      %v295 = vsel %vm213, %v186, 0
      %v298 = vsel %vm213, %v187, 0
      %300 = vmatprep.subr.mxu0 %v171
      %301 = vmatpush1.msra.mxu0 %v170
      %302 = vmatprep.subr.mxu0 %v173
      %303 = vmatpush1.msra.mxu0 %v172
      %304 = vmatprep.subr.mxu0 %v175
      %305 = vmatpush1.msra.mxu0 %v174
      %306 = vmatprep.subr.mxu0 %v177
      %307 = vmatpush1.msra.mxu0 %v176
      %308 = vmatprep.subr.mxu0 %v179
      %309 = vmatpush1.msra.mxu0 %v178
      %310 = vmatprep.subr.mxu0 %v181
      %311 = vmatpush1.msra.mxu0 %v180
      %312 = vmatprep.subr.mxu0 %v183
      %313 = vmatpush1.msra.mxu0 %v182
      %314 = vmatprep.subr.mxu0 %v185
      %315 = vmatpush1.msra.mxu0 %v184
      %316 = vmatprep.subr.mxu0 %v298
      %317 = vmatpush1.msra.mxu0 %v295
      %318 = vmatprep.subr.mxu0 0.0
      %319 = vmatpush1.msra.mxu0 0.0
      %320 = vmatprep.subr.mxu0 0.0
      %321 = vmatpush1.msra.mxu0 0.0
      %322 = vmatprep.subr.mxu0 0.0
      %323 = vmatpush1.msra.mxu0 0.0
      %324 = vmatprep.subr.mxu0 0.0
      %325 = vmatpush1.msra.mxu0 0.0
      %326 = vmatprep.subr.mxu0 0.0
      %327 = vmatpush1.msra.mxu0 0.0
      %328 = vmatprep.subr.mxu0 0.0
      %329 = vmatpush1.msra.mxu0 0.0
      %330 = vmatprep.subr.mxu0 0.0
      %331 = vmatpush1.msra.mxu0 0.0
      %332 = vmatprep.subr.mxu0 0.0
      %333 = vmatpush1.msra.mxu0 0.0
      %334 = vmatprep.subr.mxu0 0.0
      %335 = vmatpush1.msra.mxu0 0.0
      %336 = vmatprep.subr.mxu0 0.0
      %337 = vmatpush1.msra.mxu0 0.0
      %338 = vmatprep.subr.mxu0 0.0
      %339 = vmatpush1.msra.mxu0 0.0
      %340 = vmatprep.subr.mxu0 0.0
      %341 = vmatpush1.msra.mxu0 0.0
      %342 = vmatprep.subr.mxu0 0.0
      %343 = vmatpush1.msra.mxu0 0.0
      %344 = vmatprep.subr.mxu0 0.0
      %345 = vmatpush1.msra.mxu0 0.0
      %346 = vmatprep.subr.mxu0 0.0
      %347 = vmatpush1.msra.mxu0 0.0
      %348 = vmatprep.subr.mxu0 0.0
      %349 = vmatpush1.msra.mxu0 0.0
      %350 = vmatprep.subr.mxu0 0.0
      %351 = vmatpush1.msra.mxu0 0.0
      %352 = vmatprep.subr.mxu0 0.0
      %353 = vmatpush1.msra.mxu0 0.0
      %354 = vmatprep.subr.mxu0 0.0
      %355 = vmatpush1.msra.mxu0 0.0
      %356 = vmatprep.subr.mxu0 0.0
      %357 = vmatpush1.msra.mxu0 0.0
      %358 = vmatprep.subr.mxu0 0.0
      %359 = vmatpush1.msra.mxu0 0.0
      %360 = vmatprep.subr.mxu0 0.0
      %361 = vmatpush1.msra.mxu0 0.0
      %362 = vmatprep.subr.mxu0 0.0
      %363 = vmatpush1.msra.mxu0 0.0
      %364 = vmatprep.mubr.f32.mxu0 0.0
      %365 = vmatmul.mubr.f32.gmra.mrb[0].mxu0 %v292
      %v366 = vpop.f32.mrb[0].mxu0
      %v367 = vadd.f32 %v287, %v366
      %v368 = vpop.f32.mrb[0].mxu0
      %v369 = vadd.f32 %v289, %v368
      %370 = vdwg.mxu0
      %s371 = scalar_lea.vmem %s164, 16
      %v372 = vld [vmem:[%s371] sm:$0xf]
      %s373 = scalar_lea.vmem %s1, 288
      %v374 = vld [vmem:[%s373] sm:$0xff]
      %v375 = vld [vmem:[%s373 + $0x8] sm:$0xff]
      %v376 = vld [vmem:[%s373 + $0x10] sm:$0xff]
      %v377 = vld [vmem:[%s373 + $0x18] sm:$0xff]
      %v378 = vld [vmem:[%s373 + $0x20] sm:$0xff]
      %v379 = vld [vmem:[%s373 + $0x28] sm:$0xff]
      %v380 = vld [vmem:[%s373 + $0x30] sm:$0xff]
      %v381 = vld [vmem:[%s373 + $0x38] sm:$0xff]
      %v382 = vld [vmem:[%s373 + $0x40] sm:$0xff]
      %v383 = vld [vmem:[%s373 + $0x48] sm:$0xff]
      %v384 = vld [vmem:[%s373 + $0x50] sm:$0xff]
      %v385 = vld [vmem:[%s373 + $0x58] sm:$0xff]
      %v386 = vld [vmem:[%s373 + $0x60] sm:$0xff]
      %v387 = vld [vmem:[%s373 + $0x68] sm:$0xff]
      %v388 = vld [vmem:[%s373 + $0x70] sm:$0xff]
      %v389 = vld [vmem:[%s373 + $0x78] sm:$0xff]
      %v390 = vld [vmem:[%s373 + $0x80] sm:$0xf]
      %v391 = vld [vmem:[%s373 + $0x88] sm:$0xf]
      %v393 = vsel %vm209, %v372, 0
      %v396 = vsel %vm213, %v390, 0
      %v399 = vsel %vm213, %v391, 0
      %401 = vmatprep.subr.mxu0 %v375
      %402 = vmatpush1.msra.mxu0 %v374
      %403 = vmatprep.subr.mxu0 %v377
      %404 = vmatpush1.msra.mxu0 %v376
      %405 = vmatprep.subr.mxu0 %v379
      %406 = vmatpush1.msra.mxu0 %v378
      %407 = vmatprep.subr.mxu0 %v381
      %408 = vmatpush1.msra.mxu0 %v380
      %409 = vmatprep.subr.mxu0 %v383
      %410 = vmatpush1.msra.mxu0 %v382
      %411 = vmatprep.subr.mxu0 %v385
      %412 = vmatpush1.msra.mxu0 %v384
      %413 = vmatprep.subr.mxu0 %v387
      %414 = vmatpush1.msra.mxu0 %v386
      %415 = vmatprep.subr.mxu0 %v389
      %416 = vmatpush1.msra.mxu0 %v388
      %417 = vmatprep.subr.mxu0 %v399
      %418 = vmatpush1.msra.mxu0 %v396
      %419 = vmatprep.subr.mxu0 0.0
      %420 = vmatpush1.msra.mxu0 0.0
      %421 = vmatprep.subr.mxu0 0.0
      %422 = vmatpush1.msra.mxu0 0.0
      %423 = vmatprep.subr.mxu0 0.0
      %424 = vmatpush1.msra.mxu0 0.0
      %425 = vmatprep.subr.mxu0 0.0
      %426 = vmatpush1.msra.mxu0 0.0
      %427 = vmatprep.subr.mxu0 0.0
      %428 = vmatpush1.msra.mxu0 0.0
      %429 = vmatprep.subr.mxu0 0.0
      %430 = vmatpush1.msra.mxu0 0.0
      %431 = vmatprep.subr.mxu0 0.0
      %432 = vmatpush1.msra.mxu0 0.0
      %433 = vmatprep.subr.mxu0 0.0
      %434 = vmatpush1.msra.mxu0 0.0
      %435 = vmatprep.subr.mxu0 0.0
      %436 = vmatpush1.msra.mxu0 0.0
      %437 = vmatprep.subr.mxu0 0.0
      %438 = vmatpush1.msra.mxu0 0.0
      %439 = vmatprep.subr.mxu0 0.0
      %440 = vmatpush1.msra.mxu0 0.0
      %441 = vmatprep.subr.mxu0 0.0
      %442 = vmatpush1.msra.mxu0 0.0
      %443 = vmatprep.subr.mxu0 0.0
      %444 = vmatpush1.msra.mxu0 0.0
      %445 = vmatprep.subr.mxu0 0.0
      %446 = vmatpush1.msra.mxu0 0.0
      %447 = vmatprep.subr.mxu0 0.0
      %448 = vmatpush1.msra.mxu0 0.0
      %449 = vmatprep.subr.mxu0 0.0
      %450 = vmatpush1.msra.mxu0 0.0
      %451 = vmatprep.subr.mxu0 0.0
      %452 = vmatpush1.msra.mxu0 0.0
      %453 = vmatprep.subr.mxu0 0.0
      %454 = vmatpush1.msra.mxu0 0.0
      %455 = vmatprep.subr.mxu0 0.0
      %456 = vmatpush1.msra.mxu0 0.0
      %457 = vmatprep.subr.mxu0 0.0
      %458 = vmatpush1.msra.mxu0 0.0
      %459 = vmatprep.subr.mxu0 0.0
      %460 = vmatpush1.msra.mxu0 0.0
      %461 = vmatprep.subr.mxu0 0.0
      %462 = vmatpush1.msra.mxu0 0.0
      %463 = vmatprep.subr.mxu0 0.0
      %464 = vmatpush1.msra.mxu0 0.0
      %465 = vmatprep.mubr.f32.mxu0 0.0
      %466 = vmatmul.mubr.f32.gmra.mrb[0].mxu0 %v393
      %v467 = vpop.f32.mrb[0].mxu0
      %v468 = vadd.f32 0.0, %v467
      %v469 = vpop.f32.mrb[0].mxu0
      %v470 = vadd.f32 0.0, %v469
      %471 = vdwg.mxu0
      %v472 = vadd.f32 %v367, %v468
      %v473 = vadd.f32 %v369, %v470
      %s474 = scalar_lea.vmem %s164, 24
      %v475 = vld [vmem:[%s474] sm:$0xf]
      %v477 = vsel %vm209, %v475, 0
      %479 = vmatprep.subr.mxu0 %v192
      %480 = vmatpush1.msra.mxu0 %v191
      %481 = vmatprep.subr.mxu0 %v194
      %482 = vmatpush1.msra.mxu0 %v193
      %483 = vmatprep.subr.mxu0 %v196
      %484 = vmatpush1.msra.mxu0 %v195
      %485 = vmatprep.subr.mxu0 %v198
      %486 = vmatpush1.msra.mxu0 %v197
      %487 = vmatprep.subr.mxu0 %v200
      %488 = vmatpush1.msra.mxu0 %v199
      %489 = vmatprep.subr.mxu0 %v202
      %490 = vmatpush1.msra.mxu0 %v201
      %491 = vmatprep.subr.mxu0 %v204
      %492 = vmatpush1.msra.mxu0 %v203
      %493 = vmatprep.subr.mxu0 %v206
      %494 = vmatpush1.msra.mxu0 %v205
      %495 = vmatprep.subr.mxu0 %v218
      %496 = vmatpush1.msra.mxu0 %v215
      %497 = vmatprep.subr.mxu0 0.0
      %498 = vmatpush1.msra.mxu0 0.0
      %499 = vmatprep.subr.mxu0 0.0
      %500 = vmatpush1.msra.mxu0 0.0
      %501 = vmatprep.subr.mxu0 0.0
      %502 = vmatpush1.msra.mxu0 0.0
      %503 = vmatprep.subr.mxu0 0.0
      %504 = vmatpush1.msra.mxu0 0.0
      %505 = vmatprep.subr.mxu0 0.0
      %506 = vmatpush1.msra.mxu0 0.0
      %507 = vmatprep.subr.mxu0 0.0
      %508 = vmatpush1.msra.mxu0 0.0
      %509 = vmatprep.subr.mxu0 0.0
      %510 = vmatpush1.msra.mxu0 0.0
      %511 = vmatprep.subr.mxu0 0.0
      %512 = vmatpush1.msra.mxu0 0.0
      %513 = vmatprep.subr.mxu0 0.0
      %514 = vmatpush1.msra.mxu0 0.0
      %515 = vmatprep.subr.mxu0 0.0
      %516 = vmatpush1.msra.mxu0 0.0
      %517 = vmatprep.subr.mxu0 0.0
      %518 = vmatpush1.msra.mxu0 0.0
      %519 = vmatprep.subr.mxu0 0.0
      %520 = vmatpush1.msra.mxu0 0.0
      %521 = vmatprep.subr.mxu0 0.0
      %522 = vmatpush1.msra.mxu0 0.0
      %523 = vmatprep.subr.mxu0 0.0
      %524 = vmatpush1.msra.mxu0 0.0
      %525 = vmatprep.subr.mxu0 0.0
      %526 = vmatpush1.msra.mxu0 0.0
      %527 = vmatprep.subr.mxu0 0.0
      %528 = vmatpush1.msra.mxu0 0.0
      %529 = vmatprep.subr.mxu0 0.0
      %530 = vmatpush1.msra.mxu0 0.0
      %531 = vmatprep.subr.mxu0 0.0
      %532 = vmatpush1.msra.mxu0 0.0
      %533 = vmatprep.subr.mxu0 0.0
      %534 = vmatpush1.msra.mxu0 0.0
      %535 = vmatprep.subr.mxu0 0.0
      %536 = vmatpush1.msra.mxu0 0.0
      %537 = vmatprep.subr.mxu0 0.0
      %538 = vmatpush1.msra.mxu0 0.0
      %539 = vmatprep.subr.mxu0 0.0
      %540 = vmatpush1.msra.mxu0 0.0
      %541 = vmatprep.subr.mxu0 0.0
      %542 = vmatpush1.msra.mxu0 0.0
      %543 = vmatprep.mubr.f32.mxu0 0.0
      %544 = vmatmul.mubr.f32.gmra.mrb[0].mxu0 %v477
      %v545 = vpop.f32.mrb[0].mxu0
      %v546 = vadd.f32 0.0, %v545
      %v547 = vpop.f32.mrb[0].mxu0
      %v548 = vadd.f32 0.0, %v547
      %549 = vdwg.mxu0
      %550 = vmatprep.subr.mxu0 %v171
      %551 = vmatpush1.msra.mxu0 %v170
      %552 = vmatprep.subr.mxu0 %v173
      %553 = vmatpush1.msra.mxu0 %v172
      %554 = vmatprep.subr.mxu0 %v175
      %555 = vmatpush1.msra.mxu0 %v174
      %556 = vmatprep.subr.mxu0 %v177
      %557 = vmatpush1.msra.mxu0 %v176
      %558 = vmatprep.subr.mxu0 %v179
      %559 = vmatpush1.msra.mxu0 %v178
      %560 = vmatprep.subr.mxu0 %v181
      %561 = vmatpush1.msra.mxu0 %v180
      %562 = vmatprep.subr.mxu0 %v183
      %563 = vmatpush1.msra.mxu0 %v182
      %564 = vmatprep.subr.mxu0 %v185
      %565 = vmatpush1.msra.mxu0 %v184
      %566 = vmatprep.subr.mxu0 %v298
      %567 = vmatpush1.msra.mxu0 %v295
      %568 = vmatprep.subr.mxu0 0.0
      %569 = vmatpush1.msra.mxu0 0.0
      %570 = vmatprep.subr.mxu0 0.0
      %571 = vmatpush1.msra.mxu0 0.0
      %572 = vmatprep.subr.mxu0 0.0
      %573 = vmatpush1.msra.mxu0 0.0
      %574 = vmatprep.subr.mxu0 0.0
      %575 = vmatpush1.msra.mxu0 0.0
      %576 = vmatprep.subr.mxu0 0.0
      %577 = vmatpush1.msra.mxu0 0.0
      %578 = vmatprep.subr.mxu0 0.0
      %579 = vmatpush1.msra.mxu0 0.0
      %580 = vmatprep.subr.mxu0 0.0
      %581 = vmatpush1.msra.mxu0 0.0
      %582 = vmatprep.subr.mxu0 0.0
      %583 = vmatpush1.msra.mxu0 0.0
      %584 = vmatprep.subr.mxu0 0.0
      %585 = vmatpush1.msra.mxu0 0.0
      %586 = vmatprep.subr.mxu0 0.0
      %587 = vmatpush1.msra.mxu0 0.0
      %588 = vmatprep.subr.mxu0 0.0
      %589 = vmatpush1.msra.mxu0 0.0
      %590 = vmatprep.subr.mxu0 0.0
      %591 = vmatpush1.msra.mxu0 0.0
      %592 = vmatprep.subr.mxu0 0.0
      %593 = vmatpush1.msra.mxu0 0.0
      %594 = vmatprep.subr.mxu0 0.0
      %595 = vmatpush1.msra.mxu0 0.0
      %596 = vmatprep.subr.mxu0 0.0
      %597 = vmatpush1.msra.mxu0 0.0
      %598 = vmatprep.subr.mxu0 0.0
      %599 = vmatpush1.msra.mxu0 0.0
      %600 = vmatprep.subr.mxu0 0.0
      %601 = vmatpush1.msra.mxu0 0.0
      %602 = vmatprep.subr.mxu0 0.0
      %603 = vmatpush1.msra.mxu0 0.0
      %604 = vmatprep.subr.mxu0 0.0
      %605 = vmatpush1.msra.mxu0 0.0
      %606 = vmatprep.subr.mxu0 0.0
      %607 = vmatpush1.msra.mxu0 0.0
      %608 = vmatprep.subr.mxu0 0.0
      %609 = vmatpush1.msra.mxu0 0.0
      %610 = vmatprep.subr.mxu0 0.0
      %611 = vmatpush1.msra.mxu0 0.0
      %612 = vmatprep.subr.mxu0 0.0
      %613 = vmatpush1.msra.mxu0 0.0
      %614 = vmatprep.mubr.f32.mxu0 0.0
      %615 = vmatmul.mubr.f32.gmra.mrb[0].mxu0 %v393
      %v616 = vpop.f32.mrb[0].mxu0
      %v617 = vadd.f32 %v546, %v616
      %v618 = vpop.f32.mrb[0].mxu0
      %v619 = vadd.f32 %v548, %v618
      %620 = vdwg.mxu0
      %v621 = vld [vmem:[%s164 + $0x1] sm:$0xf]
      %v623 = vsel %vm209, %v621, 0
      %625 = vmatprep.subr.mxu0 %v375
      %626 = vmatpush1.msra.mxu0 %v374
      %627 = vmatprep.subr.mxu0 %v377
      %628 = vmatpush1.msra.mxu0 %v376
      %629 = vmatprep.subr.mxu0 %v379
      %630 = vmatpush1.msra.mxu0 %v378
      %631 = vmatprep.subr.mxu0 %v381
      %632 = vmatpush1.msra.mxu0 %v380
      %633 = vmatprep.subr.mxu0 %v383
      %634 = vmatpush1.msra.mxu0 %v382
      %635 = vmatprep.subr.mxu0 %v385
      %636 = vmatpush1.msra.mxu0 %v384
      %637 = vmatprep.subr.mxu0 %v387
      %638 = vmatpush1.msra.mxu0 %v386
      %639 = vmatprep.subr.mxu0 %v389
      %640 = vmatpush1.msra.mxu0 %v388
      %641 = vmatprep.subr.mxu0 %v399
      %642 = vmatpush1.msra.mxu0 %v396
      %643 = vmatprep.subr.mxu0 0.0
      %644 = vmatpush1.msra.mxu0 0.0
      %645 = vmatprep.subr.mxu0 0.0
      %646 = vmatpush1.msra.mxu0 0.0
      %647 = vmatprep.subr.mxu0 0.0
      %648 = vmatpush1.msra.mxu0 0.0
      %649 = vmatprep.subr.mxu0 0.0
      %650 = vmatpush1.msra.mxu0 0.0
      %651 = vmatprep.subr.mxu0 0.0
      %652 = vmatpush1.msra.mxu0 0.0
      %653 = vmatprep.subr.mxu0 0.0
      %654 = vmatpush1.msra.mxu0 0.0
      %655 = vmatprep.subr.mxu0 0.0
      %656 = vmatpush1.msra.mxu0 0.0
      %657 = vmatprep.subr.mxu0 0.0
      %658 = vmatpush1.msra.mxu0 0.0
      %659 = vmatprep.subr.mxu0 0.0
      %660 = vmatpush1.msra.mxu0 0.0
      %661 = vmatprep.subr.mxu0 0.0
      %662 = vmatpush1.msra.mxu0 0.0
      %663 = vmatprep.subr.mxu0 0.0
      %664 = vmatpush1.msra.mxu0 0.0
      %665 = vmatprep.subr.mxu0 0.0
      %666 = vmatpush1.msra.mxu0 0.0
      %667 = vmatprep.subr.mxu0 0.0
      %668 = vmatpush1.msra.mxu0 0.0
      %669 = vmatprep.subr.mxu0 0.0
      %670 = vmatpush1.msra.mxu0 0.0
      %671 = vmatprep.subr.mxu0 0.0
      %672 = vmatpush1.msra.mxu0 0.0
      %673 = vmatprep.subr.mxu0 0.0
      %674 = vmatpush1.msra.mxu0 0.0
      %675 = vmatprep.subr.mxu0 0.0
      %676 = vmatpush1.msra.mxu0 0.0
      %677 = vmatprep.subr.mxu0 0.0
      %678 = vmatpush1.msra.mxu0 0.0
      %679 = vmatprep.subr.mxu0 0.0
      %680 = vmatpush1.msra.mxu0 0.0
      %681 = vmatprep.subr.mxu0 0.0
      %682 = vmatpush1.msra.mxu0 0.0
      %683 = vmatprep.subr.mxu0 0.0
      %684 = vmatpush1.msra.mxu0 0.0
      %685 = vmatprep.subr.mxu0 0.0
      %686 = vmatpush1.msra.mxu0 0.0
      %687 = vmatprep.subr.mxu0 0.0
      %688 = vmatpush1.msra.mxu0 0.0
      %689 = vmatprep.mubr.f32.mxu0 0.0
      %690 = vmatmul.mubr.f32.gmra.mrb[0].mxu0 %v623
      %v691 = vpop.f32.mrb[0].mxu0
      %v692 = vadd.f32 0.0, %v691
      %v693 = vpop.f32.mrb[0].mxu0
      %v694 = vadd.f32 0.0, %v693
      %695 = vdwg.mxu0
      %v696 = vadd.f32 %v617, %v692
      %v697 = vadd.f32 %v619, %v694
      %v698 = vmax.f32 %v472, %v696
      %v699 = vmax.f32 %v473, %v697
      %v700 = vmax.f32 %v698, %v699
      %v701 = vld [vmem:[%s2] sm:$0x1]
      %v703 = vlaneseq
      %v704 = vshrl.u32 %v703, 7
      %v705 = vsub.s32 0, %v704
      %v706 = vrot.slane %v701, %v705
      %v708 = vadd.f32 %v700, %v706
      %709 = vst [vmem:[%s168] sm:$0xf] %v708
      %p710 = scmp.lt.s32.totalorder %s14, 1
      %s711 = scalar_select %p710, %s14, 1
      %s712 = smul.addr %s711, 4
      %s713 = scalar_lea.vmem %s3, %s712
      // Predicated region
      $region33: #{downsample_block_forward.1} parent=31 // pred_check
        %p714 = pneg %p100
      $region34: #{downsample_block_forward.1} parent=31 // pred_check_branch
        %716 = sbr.rel (%p714) target = $region36
      $region35: #{downsample_block_forward.1} parent=31 // pred_region
        _
      $region36: #{downsample_block_forward.1} parent=31 // pred_fallthru
        _
    $region32: #{downsample_block_forward.1} parent=5 // pred_fallthru
      _
    %p717 = scmp.le.s32.totalorder 2, %s9
    // Predicated region
    $region37: #{downsample_block_forward.1} parent=5 // pred_check
      %p718 = pneg %p717
    $region38: #{downsample_block_forward.1} parent=5 // pred_check_branch
      %720 = sbr.rel (%p718) target = $region40
    $region39: #{downsample_block_forward.1} parent=5 // pred_region
      %s721 = ssub.s32 %s9, 2
      // Predicated region
      $region41: #{downsample_block_forward.1} parent=39 // pred_check
        %p722 = pneg %p106
      $region42: #{downsample_block_forward.1} parent=39 // pred_check_branch
        %724 = sbr.rel (%p722) target = $region44
      $region43: #{downsample_block_forward.1} parent=39 // pred_region
        %p725 = scmp.lt.s32.totalorder %s15, 1
        %s726 = scalar_select %p725, %s15, 1
        %s727 = smul.addr %s726, 4
        %s728 = scalar_lea.vmem %s3, %s727
      $region44: #{downsample_block_forward.1} parent=39 // pred_fallthru
        _
    $region40: #{downsample_block_forward.1} parent=5 // pred_fallthru
      _
  $region6: #{downsample_block_forward.1} parent=0 // loop_footer
    %s13 = sadd.s32 1, %s9
  $region7: #{downsample_block_forward.1} parent=0 // loop_footer_branch
    %8 = sbr.rel target = $region3
  $region8: #{downsample_block_forward.1} parent=0 // loop_exit
    _

</llo_original>
